<compile_context>
chip_gen: v6e
topology: v6e:2x2x1
jax: 0.10.0
libtpu: 0.0.40
codegen_flags: <defaults>
</compile_context>

<pallas_src>
import numpy as np
import jax
import jax.numpy as jnp
from jax.experimental import pallas as pl
from jax.experimental.pallas import tpu as pltpu


# ---------------------------------------------------------------------------
# Helpers
# ---------------------------------------------------------------------------
def _round_up(x, m):
    return ((x + m - 1) // m) * m


def _vmem_capacity_bytes():
    try:
        info = pltpu.get_tpu_info()
        cap = getattr(info, "vmem_capacity_bytes", None)
        if cap:
            return int(cap)
    except Exception:
        pass
    try:
        kind = jax.devices()[0].device_kind.lower()
        if "tpu7" in kind or "v7" in kind:
            return 64 << 20               # v7x: 64 MiB per TensorCore
        return 128 << 20                  # v4/v5e/v5p/v6e: 128 MiB
    except Exception:
        pass
    return 64 << 20                       # conservative last resort


def _num_tensorcores():
    """Best-effort: >=2 when the grid's 'parallel' axis can shard across cores."""
    try:
        info = pltpu.get_tpu_info()
        for attr in ("num_cores", "tensorcore_count", "num_tensorcores", "core_count"):
            v = getattr(info, attr, None)
            if v:
                return int(v)
    except Exception:
        pass
    try:
        kind = jax.devices()[0].device_kind.lower()
        if "tpu7" in kind or "v7" in kind or "v4" in kind or "v5p" in kind:
            return 2
    except Exception:
        pass
    return 1


def _pad2(a, rows, cols):
    pr, pc = rows - a.shape[0], cols - a.shape[1]
    if pr == 0 and pc == 0:
        return a
    return jnp.pad(a, ((0, pr), (0, pc)))


# ---------------------------------------------------------------------------
# Pallas kernel 1: fused relu(x @ w + add + bias) — the dominant full-res conv.
#   x, w, add stream as bf16; accumulate and epilogue in f32.
# ---------------------------------------------------------------------------
def _mm_add_bias_relu_kernel(x_ref, w_ref, add_ref, b_ref, o_ref):
    acc = jnp.dot(x_ref[...], w_ref[...], preferred_element_type=jnp.float32)
    y = acc + add_ref[...].astype(jnp.float32) + b_ref[...]
    o_ref[...] = jnp.maximum(y, 0.0).astype(o_ref.dtype)


def matmul_add_bias_relu(x, w, add, bias):
    """relu(x @ w + add + bias) via Pallas.

    x: (M, K) bf16 (caller casts once), w: (K, N) f32/bf16 (BN scale folded),
    add: (M, N) bf16 (or f32) per-row additive term, bias: (N,) f32.
    Pads K/N to lane-dense multiples of 128, tiles M, returns (M, N) f32.
    """
    M, K = x.shape
    K2, Nc = w.shape
    assert K == K2
    assert add.shape == (M, Nc)
    assert bias.shape == (Nc,)

    if x.dtype != jnp.bfloat16:
        x = x.astype(jnp.bfloat16)

    Kp = _round_up(max(K, 128), 128)       # lane-dense contraction dim
    Ncp = _round_up(max(Nc, 128), 128)     # lane-dense output dim (unmasked vst)

    vmem_cap = _vmem_capacity_bytes()
    num_tc = _num_tensorcores()
    add_bytes = int(add.dtype.itemsize)

    def _need(tm):
        return (2 * Kp * Ncp * 2             # double-buffered resident weight (bf16)
                + 2 * tm * Kp * 2            # double-buffered x blocks (bf16)
                + 2 * tm * Ncp * add_bytes   # double-buffered add blocks
                + 2 * tm * Ncp * 4           # double-buffered out blocks (f32)
                + 2 * Ncp * 4)               # bias row

    budget = int(0.70 * vmem_cap)
    tm = 128
    for cand in (2048, 1024, 512, 256, 128):
        if _need(cand) <= budget - (2 << 20):
            tm = cand
            break
    # never over-pad a small M ...
    tm = min(tm, _round_up(max(M, 1), 128))
    # ... and only force >=2 grid steps when there are >=2 TensorCores to shard onto.
    if num_tc >= 2 and M > 128:
        tm = min(tm, max(128, _round_up(-(-M // 2), 128)))

    Mp = _round_up(M, tm)

    x_p = _pad2(x, Mp, Kp)
    w_p = _pad2(w.astype(jnp.bfloat16), Kp, Ncp)
    add_p = _pad2(add, Mp, Ncp)
    bias_p = _pad2(bias.reshape(1, Nc).astype(jnp.float32), 1, Ncp)

    vmem_limit = int(min(int(0.92 * vmem_cap),
                         max(32 << 20, _need(tm) + (8 << 20))))

    out = pl.pallas_call(
        _mm_add_bias_relu_kernel,
        out_shape=jax.ShapeDtypeStruct((Mp, Ncp), jnp.float32),
        grid=(Mp // tm,),
        in_specs=[
            pl.BlockSpec((tm, Kp), lambda i: (i, 0)),
            pl.BlockSpec((Kp, Ncp), lambda i: (0, 0)),
            pl.BlockSpec((tm, Ncp), lambda i: (i, 0)),
            pl.BlockSpec((1, Ncp), lambda i: (0, 0)),
        ],
        out_specs=pl.BlockSpec((tm, Ncp), lambda i: (i, 0)),
        compiler_params=pltpu.CompilerParams(
            dimension_semantics=("parallel",),
            vmem_limit_bytes=vmem_limit,
        ),
    )(x_p, w_p, add_p, bias_p)

    if Mp == M and Ncp == Nc:
        return out
    return out[:M, :Nc]


# ---------------------------------------------------------------------------
# Pallas kernel 2: batched pyramid-branch 1x1 conv + BN + ReLU, grid=(nb,).
#   No block-diagonal K inflation — each grid step uses only its own (C, red)
#   weight, so MXU FLOPs equal useful work.
# ---------------------------------------------------------------------------
def _branch_conv_kernel(x_ref, w_ref, b_ref, o_ref):
    acc = jnp.dot(x_ref[0], w_ref[0], preferred_element_type=jnp.float32)
    o_ref[0] = jnp.maximum(acc + b_ref[0], 0.0).astype(o_ref.dtype)


def branch_conv_bn_relu(x_stack, w_stack, bias_stack):
    """x_stack: (nb, Mr, Kp) bf16, w_stack: (nb, Kp, Np) bf16,
    bias_stack: (nb, 1, Np) f32 -> (nb, Mr, Np) f32 = relu(x @ w + b)."""
    nb, Mr, Kp = x_stack.shape
    Np = w_stack.shape[2]
    return pl.pallas_call(
        _branch_conv_kernel,
        out_shape=jax.ShapeDtypeStruct((nb, Mr, Np), jnp.float32),
        grid=(nb,),
        in_specs=[
            pl.BlockSpec((1, Mr, Kp), lambda i: (i, 0, 0)),
            pl.BlockSpec((1, Kp, Np), lambda i: (i, 0, 0)),
            pl.BlockSpec((1, 1, Np), lambda i: (i, 0, 0)),
        ],
        out_specs=pl.BlockSpec((1, Mr, Np), lambda i: (i, 0, 0)),
        compiler_params=pltpu.CompilerParams(
            dimension_semantics=("arbitrary",),
        ),
    )(x_stack, w_stack, bias_stack)


# ---------------------------------------------------------------------------
# Glue helpers (tiny spatial ops on bin x bin maps) — numpy, trace-time consts
# ---------------------------------------------------------------------------
def adaptive_pool_matrix(in_size, out_size):
    """Row-stochastic matrix P (out, in) reproducing nn.AdaptiveAvgPool2d."""
    P = np.zeros((out_size, in_size), dtype=np.float32)
    for i in range(out_size):
        start = (i * in_size) // out_size
        end = -(-((i + 1) * in_size) // out_size)  # ceil
        P[i, start:end] = 1.0 / (end - start)
    return P


def bilinear_matrix(out_size, in_size):
    """Interp matrix U (out, in) for F.interpolate(mode='bilinear',
    align_corners=False) along one axis (matches the PyTorch module spec)."""
    U = np.zeros((out_size, in_size), dtype=np.float32)
    if in_size == 1:
        U[:, 0] = 1.0
        return U
    scale = in_size / out_size
    for o in range(out_size):
        src = max((o + 0.5) * scale - 0.5, 0.0)
        i0 = min(int(np.floor(src)), in_size - 1)
        i1 = min(i0 + 1, in_size - 1)
        frac = src - i0
        U[o, i0] += 1.0 - frac
        U[o, i1] += frac
    return U


# ---------------------------------------------------------------------------
# Parameters (deterministic synthetic init; BN folded into scale/bias)
# ---------------------------------------------------------------------------
def init_params(key, in_dim, out_dim, bins, eps=1e-5):
    # TODO(synk): BatchNorm is applied with eval-mode running statistics
    # (mean=0, var=1 at init); training-mode batch statistics are not computed.
    red = in_dim // len(bins)
    keys = jax.random.split(key, 2 * len(bins) + 2)
    branches = []
    for i in range(len(bins)):
        w = 0.1 * jax.random.normal(keys[2 * i], (in_dim, red), jnp.float32)
        gamma = 1.0 + 0.1 * jax.random.normal(keys[2 * i + 1], (red,), jnp.float32)
        beta = jnp.zeros((red,), jnp.float32)
        run_mean = jnp.zeros((red,), jnp.float32)
        run_var = jnp.ones((red,), jnp.float32)
        scale = gamma / jnp.sqrt(run_var + eps)
        bias = beta - run_mean * scale
        branches.append((w, scale, bias))

    c_cat = in_dim + red * len(bins)
    w_f = 0.1 * jax.random.normal(keys[-2], (c_cat, out_dim), jnp.float32)
    gamma_f = 1.0 + 0.1 * jax.random.normal(keys[-1], (out_dim,), jnp.float32)
    beta_f = jnp.zeros((out_dim,), jnp.float32)
    run_mean_f = jnp.zeros((out_dim,), jnp.float32)
    run_var_f = jnp.ones((out_dim,), jnp.float32)
    scale_f = gamma_f / jnp.sqrt(run_var_f + eps)
    bias_f = beta_f - run_mean_f * scale_f
    return {"branches": branches, "final": (w_f, scale_f, bias_f), "red": red}


# ---------------------------------------------------------------------------
# Forward pass
# ---------------------------------------------------------------------------
def pyramid_pooling_forward(x_nchw, params, bins=(1, 2, 3, 6)):
    N, C, H, W = x_nchw.shape
    nb = len(bins)
    red = params["red"]
    max_bin = max(bins)

    # one full-resolution pass: NCHW -> NHWC and downcast to bf16 (MXU-native)
    x = jnp.transpose(x_nchw, (0, 2, 3, 1)).astype(jnp.bfloat16)      # NHWC bf16
    x_flat = x.reshape(N * H * W, C)

    # ---- fused adaptive average pooling: single pass over x for all bins ----
    Ph_all = jnp.asarray(
        np.concatenate([adaptive_pool_matrix(H, b) for b in bins], axis=0),
        jnp.bfloat16)
    pooled_h = jnp.einsum("ph,nhwc->npwc", Ph_all, x,
                          preferred_element_type=jnp.float32)          # reads x once

    Cp = _round_up(max(C, 128), 128)
    redp = _round_up(max(red, 128), 128)
    Mrp = _round_up(N * max_bin * max_bin, 8)

    pooled_rows, w_rows, b_rows = [], [], []
    off = 0
    for i, b in enumerate(bins):
        w_b, s_b, bias_b = params["branches"][i]
        Pw = jnp.asarray(adaptive_pool_matrix(W, b))
        pooled_b = jnp.einsum("qw,niwc->niqc", Pw, pooled_h[:, off:off + b])
        off += b
        pf = pooled_b.reshape(N * b * b, C)
        pooled_rows.append(
            jnp.pad(pf, ((0, Mrp - N * b * b), (0, Cp - C))).astype(jnp.bfloat16))
        w_rows.append(
            jnp.pad(w_b * s_b.reshape(1, red),
                    ((0, Cp - C), (0, redp - red))).astype(jnp.bfloat16))
        b_rows.append(jnp.pad(bias_b.reshape(1, red), ((0, 0), (0, redp - red))))

    pooled_stack = jnp.stack(pooled_rows, axis=0)                       # (nb, Mrp, Cp)
    w_stack = jnp.stack(w_rows, axis=0)                                 # (nb, Cp, redp)
    bias_stack = jnp.stack(b_rows, axis=0).astype(jnp.float32)          # (nb, 1, redp)

    # ONE batched Pallas launch for all pyramid-branch 1x1 conv + BN + ReLU
    y_all = branch_conv_bn_relu(pooled_stack, w_stack, bias_stack)      # (nb, Mrp, redp)

    # ---- tail restructure: commute the final 1x1 conv with the upsample ----
    w_f, scale_f, bias_f = params["final"]
    wf_sc = w_f * scale_f.reshape(1, -1)                                # fold BN scale
    out_dim = w_f.shape[1]

    zo_list = []
    Uh_np = np.zeros((nb, H, max_bin), np.float32)
    Uw_np = np.zeros((nb, W, max_bin), np.float32)
    for i, b in enumerate(bins):
        y_b = y_all[i, :N * b * b, :red].reshape(N, b, b, red)
        wf_b = wf_sc[C + i * red: C + (i + 1) * red]                    # (red, out_dim)
        z_b = jnp.einsum("nijr,ro->nijo", y_b, wf_b)                    # tiny bxb map
        zo_list.append(jnp.pad(
            z_b, ((0, 0), (0, max_bin - b), (0, max_bin - b), (0, 0))))
        Uh_np[i, :, :b] = bilinear_matrix(H, b)
        Uw_np[i, :, :b] = bilinear_matrix(W, b)

    zo_stack = jnp.stack(zo_list, axis=0).astype(jnp.bfloat16)          # (nb,N,mb,mb,O)
    Uh_bf = jnp.asarray(Uh_np, jnp.bfloat16)
    Uw_bf = jnp.asarray(Uw_np, jnp.bfloat16)

    # one-pass stacked upsample + branch sum: small intermediate, single
    # full-resolution write; streamed into the final kernel as bf16 `add`.
    t = jnp.einsum("bwj,bnijo->bniwo", Uw_bf, zo_stack)                 # tiny
    branch_sum = jnp.einsum("bhi,bniwo->nhwo", Uh_bf, t)                # (N,H,W,O) bf16
    add_flat = branch_sum.reshape(N * H * W, out_dim)

    # final full-res conv: relu(x @ Wf[:C] + sum_b upsample(z_b) + bias_f)
    out_flat = matmul_add_bias_relu(x_flat, wf_sc[:C], add=add_flat, bias=bias_f)
    out = out_flat.reshape(N, H, W, out_dim)
    return jnp.transpose(out, (0, 3, 1, 2))                             # back to NCHW


# ---------------------------------------------------------------------------
# Pure-JAX reference (mirrors the original PyTorch concat formulation, f32)
# ---------------------------------------------------------------------------
def _reference_forward(x_nchw, params, bins):
    N, C, H, W = x_nchw.shape
    x = jnp.transpose(x_nchw, (0, 2, 3, 1)).astype(jnp.float32)
    feats = [x]
    for b, (w_conv, scale, bias) in zip(bins, params["branches"]):
        Ph = jnp.asarray(adaptive_pool_matrix(H, b))
        Pw = jnp.asarray(adaptive_pool_matrix(W, b))
        pooled = jnp.einsum("ih,jw,nhwc->nijc", Ph, Pw, x)
        y = jnp.maximum((pooled @ w_conv) * scale + bias, 0.0)
        Uh = jnp.asarray(bilinear_matrix(H, b))
        Uw = jnp.asarray(bilinear_matrix(W, b))
        feats.append(jnp.einsum("hi,wj,nijc->nhwc", Uh, Uw, y))
    cat = jnp.concatenate(feats, axis=-1)
    w_f, scale_f, bias_f = params["final"]
    out = jnp.maximum((cat @ w_f) * scale_f + bias_f, 0.0)
    return jnp.transpose(out, (0, 3, 1, 2))


if __name__ == "__main__":
    in_dim, out_dim = 32, 16
    bins = (1, 2, 3, 6)
    N, H, W = 2, 16, 16

    key = jax.random.PRNGKey(0)
    kx, kp = jax.random.split(key)
    x = jax.random.normal(kx, (N, in_dim, H, W), jnp.float32)
    params = init_params(kp, in_dim, out_dim, bins)

    out = pyramid_pooling_forward(x, params, bins)
    out = jax.block_until_ready(out)

    assert out.shape == (N, out_dim, H, W), out.shape
    assert bool(jnp.all(jnp.isfinite(out)))
    assert bool(jnp.all(out >= 0.0))  # ReLU output

    ref = _reference_forward(x, params, bins)
    max_err = float(jnp.max(jnp.abs(out - ref)))
    assert max_err < 5e-2, f"mismatch vs reference: {max_err}"

    print("KERNEL_OK")
</pallas_src>

<mosaic_0001>
module attributes {stable_mosaic.version = 11 : i64} {
  func.func @_branch_conv_kernel(%arg0: i32, %arg1: memref<1x72x128xbf16, #tpu.memory_space<vmem>>, %arg2: memref<1x128x128xbf16, #tpu.memory_space<vmem>>, %arg3: memref<1x1x128xf32, #tpu.memory_space<vmem>>, %arg4: memref<1x72x128xf32, #tpu.memory_space<vmem>>) attributes {dimension_semantics = [#tpu.dimension_semantics<arbitrary>], iteration_bounds = array<i64: 4>, scalar_prefetch = 0 : i64, scratch_operands = 0 : i64, tpu.core_type = #tpu.core_type<tc>, window_params = [{transform_indices = @transform_0, window_bounds = array<i64: 1, 72, 128>}, {transform_indices = @transform_1, window_bounds = array<i64: 1, 128, 128>}, {transform_indices = @transform_2, window_bounds = array<i64: 1, 1, 128>}, {transform_indices = @transform_3, window_bounds = array<i64: 1, 72, 128>}]} {
    %c0 = arith.constant 0 : index
    %c0_0 = arith.constant 0 : index
    %c0_1 = arith.constant 0 : index
    %0 = vector.load %arg1[%c0, %c0_0, %c0_1] : memref<1x72x128xbf16, #tpu.memory_space<vmem>>, vector<1x72x128xbf16>
    %1 = vector.shape_cast %0 : vector<1x72x128xbf16> to vector<72x128xbf16>
    %c0_2 = arith.constant 0 : index
    %c0_3 = arith.constant 0 : index
    %c0_4 = arith.constant 0 : index
    %2 = vector.load %arg2[%c0_2, %c0_3, %c0_4] : memref<1x128x128xbf16, #tpu.memory_space<vmem>>, vector<1x128x128xbf16>
    %3 = vector.shape_cast %2 : vector<1x128x128xbf16> to vector<128x128xbf16>
    %cst = arith.constant dense<0.000000e+00> : vector<72x128xf32>
    %4 = tpu.matmul %1, %3, %cst {dimension_numbers = #tpu.dot_dimension_numbers<[1], [0], [0], [1], [0, 0, 1, 1], [], []>} : vector<72x128xbf16>, vector<128x128xbf16>, vector<72x128xf32> -> vector<72x128xf32>
    %c0_5 = arith.constant 0 : index
    %c0_6 = arith.constant 0 : index
    %c0_7 = arith.constant 0 : index
    %5 = vector.load %arg3[%c0_5, %c0_6, %c0_7] : memref<1x1x128xf32, #tpu.memory_space<vmem>>, vector<1x1x128xf32>
    %6 = vector.shape_cast %5 : vector<1x1x128xf32> to vector<1x128xf32>
    %7 = vector.broadcast %6 : vector<1x128xf32> to vector<72x128xf32>
    %8 = arith.addf %4, %7 : vector<72x128xf32>
    %cst_8 = arith.constant 0.000000e+00 : f32
    %9 = vector.broadcast %cst_8 : f32 to vector<72x128xf32>
    %10 = arith.maximumf %8, %9 : vector<72x128xf32>
    %c0_9 = arith.constant 0 : index
    %c0_10 = arith.constant 0 : index
    %c0_11 = arith.constant 0 : index
    %11 = vector.load %arg4[%c0_9, %c0_10, %c0_11] : memref<1x72x128xf32, #tpu.memory_space<vmem>>, vector<1x72x128xf32>
    %12 = vector.shape_cast %11 : vector<1x72x128xf32> to vector<72x128xf32>
    %13 = vector.shape_cast %10 : vector<72x128xf32> to vector<1x72x128xf32>
    tpu.vector_store %arg4[%c0_9, %c0_10, %c0_11], %13 {strides = array<i32>} : memref<1x72x128xf32, #tpu.memory_space<vmem>>, vector<1x72x128xf32>,
    return
  }
  func.func @transform_0(%arg0: i32) -> (i32, i32, i32) {
    %c0_i32 = arith.constant 0 : i32
    %c0_i32_0 = arith.constant 0 : i32
    %c0_i32_1 = arith.constant 0 : i32
    return %arg0, %c0_i32, %c0_i32_0 : i32, i32, i32
  }
  func.func @transform_1(%arg0: i32) -> (i32, i32, i32) {
    %c0_i32 = arith.constant 0 : i32
    %c0_i32_0 = arith.constant 0 : i32
    %c0_i32_1 = arith.constant 0 : i32
    return %arg0, %c0_i32, %c0_i32_0 : i32, i32, i32
  }
  func.func @transform_2(%arg0: i32) -> (i32, i32, i32) {
    %c0_i32 = arith.constant 0 : i32
    %c0_i32_0 = arith.constant 0 : i32
    %c0_i32_1 = arith.constant 0 : i32
    return %arg0, %c0_i32, %c0_i32_0 : i32, i32, i32
  }
  func.func @transform_3(%arg0: i32) -> (i32, i32, i32) {
    %c0_i32 = arith.constant 0 : i32
    %c0_i32_0 = arith.constant 0 : i32
    %c0_i32_1 = arith.constant 0 : i32
    return %arg0, %c0_i32, %c0_i32_0 : i32, i32, i32
  }
}

</mosaic_0001>

<llo_original>
// kernel: tpu_custom_call.1
$region0: #{tpu_custom_call.1}
  #allocation0 [shape = 'u32[]', space=smem, size = 0x4, offset = 0x4, fixed_abs, tag = 'smem constant byte address 0x4 - core index']
  #allocation1 [shape = 'u32[144,128]{1,0:T(1,128)}', space=vmem, size = 0x12000, scoped, tag = 'internal scratch']
  %s0 = inlined_call_operand.hbm [shape: bf16[4,72,128], index: 0, kind: input, shape index: {}]
  %s1 = inlined_call_operand.hbm [shape: bf16[4,128,128], index: 1, kind: input, shape index: {}]
  %s2 = inlined_call_operand.hbm [shape: f32[4,1,128], index: 2, kind: input, shape index: {}]
  %s3 = inlined_call_operand.hbm [shape: f32[4,72,128], index: 3, kind: output, shape index: {}]
  %s4 = sld [smem:[#allocation0]]
  $region57: #{tpu_custom_call.1} parent=0
    _
  %s6 = ssub.s32 1, %s4
  %s7 = scalar_select 0, %s6, %s4
  $region1: #{tpu_custom_call.1} parent=0
    #allocation2 [shape = 'u8[36864]{0}', space=vmem, size = 0x9000, scoped, tag = 'input window, operand 0']
    #allocation3 [shape = 's32[2]{0}', space=sflag, size = 0x8, scoped, tag = 'scoped memory for tpu_custom_call.1']
    #allocation4 [shape = 's32[2]{0}', space=sflag, size = 0x8, scoped, tag = 'scoped memory for tpu_custom_call.1']
    #allocation5 [shape = 'u8[65536]{0}', space=vmem, size = 0x10000, scoped, tag = 'input window, operand 1']
    #allocation6 [shape = 's32[2]{0}', space=sflag, size = 0x8, scoped, tag = 'scoped memory for tpu_custom_call.1']
    #allocation7 [shape = 'u8[1024]{0}', space=vmem, size = 0x400, scoped, tag = 'input window, operand 2']
    #allocation8 [shape = 'u8[73728]{0}', space=vmem, size = 0x12000, scoped, tag = 'output window, operand 0']
    %8 = vsyncpa [#allocation3], 0
    %s9 = scalar_lea.sflag [#allocation3], 1
    %10 = vsyncpa %s9, 0
    %11 = vsyncpa [#allocation6], 0
    %s12 = scalar_lea.sflag [#allocation6], 1
    %13 = vsyncpa %s12, 0
    %14 = vsyncpa [#allocation4], 0
    %s15 = scalar_lea.sflag [#allocation4], 1
    %16 = vsyncpa %s15, 0
    loop: start=0, step=1, limit=6
    $region2: #{tpu_custom_call.1} parent=1 // loop_pre_header
      _
    $region3: #{tpu_custom_call.1} parent=1 // loop_header
      %s18 = sphi 0, %s22
      %p19 = scmp.ge.s32.totalorder %s18, 6
      %s28 = sphi 0, %s30
      %s31 = sphi 0, %s28
      %s32 = sphi 0, %s31
      %s48 = sphi 0, %s32
      %s54 = sphi 0, %s56
      %s57 = sphi 0, %s54
      %s58 = sphi 0, %s57
      %s74 = sphi 0, %s58
      %s80 = sphi 0, %s82
      %s83 = sphi 0, %s80
      %s84 = sphi 0, %s83
      %s100 = sphi 0, %s84
      %s106 = sphi 0, %s108
      %s109 = sphi 0, %s106
      %s110 = sphi 0, %s109
      %s126 = sphi 0, %s110
    $region4: #{tpu_custom_call.1} parent=1 // loop_header_branch
      %21 = sbr.rel (%p19) target = $region8
    $region5: #{tpu_custom_call.1} parent=1 // loop_body
      %s23 = ssub.s32 %s18, 1
      %s24 = ssub.s32 %s18, 2
      %s25 = sadd.s32 %s18, 1
      %s26 = ssub.s32 %s18, %s25
      %p27 = scmp.eq.s32.totalorder %s26, 0
      %s29 = sadd.s32 %s28, 1
      %s30 = scalar_select %p27, %s28, %s29
      %p33 = pneg %p27
      %p34 = scmp.eq.s32.totalorder %s18, 3
      %p35 = por %p33, %p34
      %p36 = scmp.ne.s32.totalorder %s28, %s31
      %p37 = scmp.eq.s32.totalorder %s18, 0
      %p38 = por %p36, %p37
      %p39 = scmp.ne.s32.totalorder %s28, %s31
      %p40 = scmp.eq.s32.totalorder %s23, 3
      %p41 = por %p39, %p40
      %p42 = scmp.ne.s32.totalorder %s31, %s32
      %p43 = scmp.eq.s32.totalorder %s23, 0
      %p44 = por %p42, %p43
      %p45 = scmp.ne.s32.totalorder %s31, %s32
      %p46 = scmp.eq.s32.totalorder %s24, 3
      %p47 = por %p45, %p46
      %p49 = scmp.ne.s32.totalorder %s32, %s48
      %p50 = scmp.eq.s32.totalorder %s24, 0
      %p51 = por %p49, %p50
      %s52 = ssub.s32 %s18, %s25
      %p53 = scmp.eq.s32.totalorder %s52, 0
      %s55 = sadd.s32 %s54, 1
      %s56 = scalar_select %p53, %s54, %s55
      %p59 = pneg %p53
      %p60 = scmp.eq.s32.totalorder %s18, 3
      %p61 = por %p59, %p60
      %p62 = scmp.ne.s32.totalorder %s54, %s57
      %p63 = scmp.eq.s32.totalorder %s18, 0
      %p64 = por %p62, %p63
      %p65 = scmp.ne.s32.totalorder %s54, %s57
      %p66 = scmp.eq.s32.totalorder %s23, 3
      %p67 = por %p65, %p66
      %p68 = scmp.ne.s32.totalorder %s57, %s58
      %p69 = scmp.eq.s32.totalorder %s23, 0
      %p70 = por %p68, %p69
      %p71 = scmp.ne.s32.totalorder %s57, %s58
      %p72 = scmp.eq.s32.totalorder %s24, 3
      %p73 = por %p71, %p72
      %p75 = scmp.ne.s32.totalorder %s58, %s74
      %p76 = scmp.eq.s32.totalorder %s24, 0
      %p77 = por %p75, %p76
      %s78 = ssub.s32 %s18, %s25
      %p79 = scmp.eq.s32.totalorder %s78, 0
      %s81 = sadd.s32 %s80, 1
      %s82 = scalar_select %p79, %s80, %s81
      %p85 = pneg %p79
      %p86 = scmp.eq.s32.totalorder %s18, 3
      %p87 = por %p85, %p86
      %p88 = scmp.ne.s32.totalorder %s80, %s83
      %p89 = scmp.eq.s32.totalorder %s18, 0
      %p90 = por %p88, %p89
      %p91 = scmp.ne.s32.totalorder %s80, %s83
      %p92 = scmp.eq.s32.totalorder %s23, 3
      %p93 = por %p91, %p92
      %p94 = scmp.ne.s32.totalorder %s83, %s84
      %p95 = scmp.eq.s32.totalorder %s23, 0
      %p96 = por %p94, %p95
      %p97 = scmp.ne.s32.totalorder %s83, %s84
      %p98 = scmp.eq.s32.totalorder %s24, 3
      %p99 = por %p97, %p98
      %p101 = scmp.ne.s32.totalorder %s84, %s100
      %p102 = scmp.eq.s32.totalorder %s24, 0
      %p103 = por %p101, %p102
      %s104 = ssub.s32 %s18, %s25
      %p105 = scmp.eq.s32.totalorder %s104, 0
      %s107 = sadd.s32 %s106, 1
      %s108 = scalar_select %p105, %s106, %s107
      %p111 = pneg %p105
      %p112 = scmp.eq.s32.totalorder %s18, 3
      %p113 = por %p111, %p112
      %p114 = scmp.ne.s32.totalorder %s106, %s109
      %p115 = scmp.eq.s32.totalorder %s18, 0
      %p116 = por %p114, %p115
      %p117 = scmp.ne.s32.totalorder %s106, %s109
      %p118 = scmp.eq.s32.totalorder %s23, 3
      %p119 = por %p117, %p118
      %p120 = scmp.ne.s32.totalorder %s109, %s110
      %p121 = scmp.eq.s32.totalorder %s23, 0
      %p122 = por %p120, %p121
      %p123 = scmp.ne.s32.totalorder %s109, %s110
      %p124 = scmp.eq.s32.totalorder %s24, 3
      %p125 = por %p123, %p124
      %p127 = scmp.ne.s32.totalorder %s110, %s126
      %p128 = scmp.eq.s32.totalorder %s24, 0
      %p129 = por %p127, %p128
      %p130 = scmp.le.s32.totalorder 1, %s18
      %p131 = scmp.lt.s32.totalorder %s18, 5
      %p132 = pnand %p130, %p131
      %p133 = pneg %p132
      // Predicated region
      $region9: #{tpu_custom_call.1} parent=5 // pred_check
        _
      $region10: #{tpu_custom_call.1} parent=5 // pred_check_branch
        %135 = sbr.rel (%p132) target = $region12
      $region11: #{tpu_custom_call.1} parent=5 // pred_region
        %s136 = ssub.s32 %s18, 1
      $region12: #{tpu_custom_call.1} parent=5 // pred_fallthru
        _
      %p137 = scmp.lt.s32.totalorder %s18, 4
      // Predicated region
      $region13: #{tpu_custom_call.1} parent=5 // pred_check
        %p138 = pneg %p137
      $region14: #{tpu_custom_call.1} parent=5 // pred_check_branch
        %140 = sbr.rel (%p138) target = $region16
      $region15: #{tpu_custom_call.1} parent=5 // pred_region
        // Predicated region
        $region17: #{tpu_custom_call.1} parent=15 // pred_check
          %p141 = pneg %p38
        $region18: #{tpu_custom_call.1} parent=15 // pred_check_branch
          %143 = sbr.rel (%p141) target = $region20
        $region19: #{tpu_custom_call.1} parent=15 // pred_region
          %s144 = sand.u32 %s28, 1
          %s145 = scalar_lea.sflag [#allocation3], %s144
          %s146 = sand.u32 %s28, 1
          %s147 = smul.addr %s146, 36
          %s148 = scalar_lea.vmem [#allocation2], %s147
          %s150 = ssub.s32 576, 576
          %151 = vsyncadd %s145, %s150
          %s152 = smul.addr %s18, 9
          %s153 = smul.addr %s152, 64
          %s154 = scalar_lea.hbm %s0, %s153
          %s155 = sshll.u32 %s148, 4
          %s156 = int_to_ptr.vmem [resolvable:$true] %s155
          %161 = dma.hbm_to_vmem [thread:$0]  %s154, 576, %s156, %s145, 64, 64, 4
        $region20: #{tpu_custom_call.1} parent=15 // pred_fallthru
          _
        // Predicated region
        $region21: #{tpu_custom_call.1} parent=15 // pred_check
          %p162 = pneg %p64
        $region22: #{tpu_custom_call.1} parent=15 // pred_check_branch
          %164 = sbr.rel (%p162) target = $region24
        $region23: #{tpu_custom_call.1} parent=15 // pred_region
          %s165 = sand.u32 %s18, 1
          %s166 = scalar_lea.sflag [#allocation6], %s165
          %s167 = sand.u32 %s54, 1
          %s168 = smul.addr %s167, 64
          %s169 = scalar_lea.vmem [#allocation5], %s168
          %s171 = ssub.s32 1024, 1024
          %172 = vsyncadd %s166, %s171
          %s173 = smul.addr %s18, 16
          %s174 = smul.addr %s173, 64
          %s175 = scalar_lea.hbm %s1, %s174
          %s176 = sshll.u32 %s169, 4
          %s177 = int_to_ptr.vmem [resolvable:$true] %s176
          %182 = dma.hbm_to_vmem [thread:$0]  %s175, 1024, %s177, %s166, 64, 64, 4
        $region24: #{tpu_custom_call.1} parent=15 // pred_fallthru
          _
        // Predicated region
        $region25: #{tpu_custom_call.1} parent=15 // pred_check
          %p183 = pneg %p90
        $region26: #{tpu_custom_call.1} parent=15 // pred_check_branch
          %185 = sbr.rel (%p183) target = $region28
        $region27: #{tpu_custom_call.1} parent=15 // pred_region
          %s186 = sand.u32 %s18, 1
          %s187 = scalar_lea.sflag [#allocation6], %s186
          %s188 = sand.u32 %s80, 1
          %s189 = scalar_lea.vmem [#allocation7], %s188
          %s191 = ssub.s32 16, 16
          %192 = vsyncadd %s187, %s191
          %s193 = smul.addr %s18, 16
          %s194 = scalar_lea.hbm %s2, %s193
          %s196 = sshll.u32 %s189, 4
          %s197 = int_to_ptr.vmem [resolvable:$true] %s196
          %199 = dma.hbm_to_vmem [thread:$0]  %s194, 16, %s197, %s187
        $region28: #{tpu_custom_call.1} parent=15 // pred_fallthru
          _
      $region16: #{tpu_custom_call.1} parent=5 // pred_fallthru
        _
      %p200 = scmp.le.s32.totalorder 1, %s18
      %p201 = scmp.lt.s32.totalorder %s18, 5
      %p202 = pnand %p200, %p201
      %p203 = pneg %p202
      // Predicated region
      $region29: #{tpu_custom_call.1} parent=5 // pred_check
        _
      $region30: #{tpu_custom_call.1} parent=5 // pred_check_branch
        %205 = sbr.rel (%p202) target = $region32
      $region31: #{tpu_custom_call.1} parent=5 // pred_region
        %s206 = ssub.s32 %s18, 1
        %s207 = sand.u32 %s31, 1
        %s208 = scalar_lea.sflag [#allocation3], %s207
        %s209 = sand.u32 %s31, 1
        %s210 = smul.addr %s209, 36
        %s211 = scalar_lea.vmem [#allocation2], %s210
        // Predicated region
        $region33: #{tpu_custom_call.1} parent=31 // pred_check
          %p212 = pneg %p44
        $region34: #{tpu_custom_call.1} parent=31 // pred_check_branch
          %214 = sbr.rel (%p212) target = $region36
        $region35: #{tpu_custom_call.1} parent=31 // pred_region
          %215 = dma.done %s208, 576
        $region36: #{tpu_custom_call.1} parent=31 // pred_fallthru
          _
        %s216 = sand.u32 %s23, 1
        %s217 = scalar_lea.sflag [#allocation6], %s216
        %s218 = sand.u32 %s57, 1
        %s219 = smul.addr %s218, 64
        %s220 = scalar_lea.vmem [#allocation5], %s219
        // Predicated region
        $region37: #{tpu_custom_call.1} parent=31 // pred_check
          %p221 = pneg %p70
        $region38: #{tpu_custom_call.1} parent=31 // pred_check_branch
          %223 = sbr.rel (%p221) target = $region40
        $region39: #{tpu_custom_call.1} parent=31 // pred_region
          %224 = dma.done %s217, 1024
        $region40: #{tpu_custom_call.1} parent=31 // pred_fallthru
          _
        %s225 = sand.u32 %s23, 1
        %s226 = scalar_lea.sflag [#allocation6], %s225
        %s227 = sand.u32 %s83, 1
        %s228 = scalar_lea.vmem [#allocation7], %s227
        // Predicated region
        $region41: #{tpu_custom_call.1} parent=31 // pred_check
          %p229 = pneg %p96
        $region42: #{tpu_custom_call.1} parent=31 // pred_check_branch
          %231 = sbr.rel (%p229) target = $region44
        $region43: #{tpu_custom_call.1} parent=31 // pred_region
          %232 = dma.done %s226, 16
        $region44: #{tpu_custom_call.1} parent=31 // pred_fallthru
          _
        %s233 = sand.u32 %s31, 1
        %s234 = scalar_lea.sflag [#allocation3], %s233
        %s235 = sand.u32 %s31, 1
        %s236 = smul.addr %s235, 36
        %s237 = scalar_lea.vmem [#allocation2], %s236
        %p238 = pneg %p44
        %p239 = pneg %p41
        %s240 = sand.u32 %s23, 1
        %s241 = scalar_lea.sflag [#allocation6], %s240
        %s242 = sand.u32 %s57, 1
        %s243 = smul.addr %s242, 64
        %s244 = scalar_lea.vmem [#allocation5], %s243
        %p245 = pneg %p70
        %p246 = pneg %p67
        %s247 = sand.u32 %s23, 1
        %s248 = scalar_lea.sflag [#allocation6], %s247
        %s249 = sand.u32 %s83, 1
        %s250 = scalar_lea.vmem [#allocation7], %s249
        %p251 = pneg %p96
        %p252 = pneg %p93
        %p253 = pneg %p122
        %p254 = pneg %p119
        %s255 = sand.u32 %s109, 1
        %s256 = scalar_lea.sflag [#allocation4], %s255
        %s257 = sand.u32 %s109, 1
        %s258 = smul.addr %s257, 72
        %s259 = scalar_lea.vmem [#allocation8], %s258
        %v261 = vld [vmem:[%s211] sm:$0xf]
        %v262 = vld [vmem:[%s211 + $0x4] sm:$0xf]
        %v263 = vld [vmem:[%s211 + $0x8] sm:$0xf]
        %v264 = vld [vmem:[%s211 + $0xc] sm:$0xf]
        %v265 = vld [vmem:[%s211 + $0x10] sm:$0xf]
        %v266 = vld [vmem:[%s211 + $0x14] sm:$0xf]
        %v267 = vld [vmem:[%s211 + $0x18] sm:$0xf]
        %v268 = vld [vmem:[%s211 + $0x1c] sm:$0xf]
        %v269 = vld [vmem:[%s211 + $0x20] sm:$0xf]
        %v270 = vld [vmem:[%s220] sm:$0xf]
        %v271 = vld [vmem:[%s220 + $0x4] sm:$0xf]
        %v272 = vld [vmem:[%s220 + $0x8] sm:$0xf]
        %v273 = vld [vmem:[%s220 + $0xc] sm:$0xf]
        %v274 = vld [vmem:[%s220 + $0x10] sm:$0xf]
        %v275 = vld [vmem:[%s220 + $0x14] sm:$0xf]
        %v276 = vld [vmem:[%s220 + $0x18] sm:$0xf]
        %v277 = vld [vmem:[%s220 + $0x1c] sm:$0xf]
        %v278 = vld [vmem:[%s220 + $0x20] sm:$0xf]
        %v279 = vld [vmem:[%s220 + $0x24] sm:$0xf]
        %v280 = vld [vmem:[%s220 + $0x28] sm:$0xf]
        %v281 = vld [vmem:[%s220 + $0x2c] sm:$0xf]
        %v282 = vld [vmem:[%s220 + $0x30] sm:$0xf]
        %v283 = vld [vmem:[%s220 + $0x34] sm:$0xf]
        %v284 = vld [vmem:[%s220 + $0x38] sm:$0xf]
        %v285 = vld [vmem:[%s220 + $0x3c] sm:$0xf]
        %v286 = vld [vmem:[%s228] sm:$0x1]
        %v288 = vlaneseq
        %v289 = vshrl.u32 %v288, 7
        %v290 = vsub.s32 0, %v289
        %v291 = vrot.slane %v286, %v290
        %v302 = vunpack.c.l.b16 %v261
        %v303 = vunpack.c.l.b16 %v262
        %v304 = vunpack.c.l.b16 %v263
        %v305 = vunpack.c.l.b16 %v264
        %v306 = vunpack.c.l.b16 %v265
        %v307 = vunpack.c.l.b16 %v266
        %v308 = vunpack.c.l.b16 %v267
        %v309 = vunpack.c.l.b16 %v268
        %v310 = vunpack.c.l.b16 %v269
        %v311 = vpack.c.b16 %v303, %v302
        %v312 = vpack.c.b16 %v305, %v304
        %v313 = vpack.c.b16 %v307, %v306
        %v314 = vpack.c.b16 %v309, %v308
        %v315 = vpack.c.b16 %v310, %v310
        %v337 = vunpack.c.l.b16 %v270
        %v338 = vunpack.c.l.b16 %v271
        %v339 = vunpack.c.l.b16 %v272
        %v340 = vunpack.c.l.b16 %v273
        %v341 = vunpack.c.l.b16 %v274
        %v342 = vunpack.c.l.b16 %v275
        %v343 = vunpack.c.l.b16 %v276
        %v344 = vunpack.c.l.b16 %v277
        %v345 = vunpack.c.l.b16 %v278
        %v346 = vunpack.c.l.b16 %v279
        %v347 = vunpack.c.l.b16 %v280
        %v348 = vunpack.c.l.b16 %v281
        %v349 = vunpack.c.l.b16 %v282
        %v350 = vunpack.c.l.b16 %v283
        %v351 = vunpack.c.l.b16 %v284
        %v352 = vunpack.c.l.b16 %v285
        %v353 = vpack.c.b16 %v338, %v337
        %v354 = vpack.c.b16 %v340, %v339
        %v355 = vpack.c.b16 %v342, %v341
        %v356 = vpack.c.b16 %v344, %v343
        %v357 = vpack.c.b16 %v346, %v345
        %v358 = vpack.c.b16 %v348, %v347
        %v359 = vpack.c.b16 %v350, %v349
        %v360 = vpack.c.b16 %v352, %v351
        %369 = vmatprep.subr.bf16.mxu0 0
        %370 = vmatpush1.bf16.msra.mxu0 %v360
        %371 = vmatprep.subr.bf16.mxu0 0
        %372 = vmatpush1.bf16.msra.mxu0 %v359
        %373 = vmatprep.subr.bf16.mxu0 0
        %374 = vmatpush1.bf16.msra.mxu0 %v358
        %375 = vmatprep.subr.bf16.mxu0 0
        %376 = vmatpush1.bf16.msra.mxu0 %v357
        %377 = vmatprep.subr.bf16.mxu0 0
        %378 = vmatpush1.bf16.msra.mxu0 %v356
        %379 = vmatprep.subr.bf16.mxu0 0
        %380 = vmatpush1.bf16.msra.mxu0 %v355
        %381 = vmatprep.subr.bf16.mxu0 0
        %382 = vmatpush1.bf16.msra.mxu0 %v354
        %383 = vmatprep.subr.bf16.mxu0 0
        %384 = vmatpush1.bf16.msra.mxu0 %v353
        %385 = vmatprep.subr.bf16.mxu0 0
        %386 = vmatpush2.bf16.msra.mxu0 0
        %387 = vmatprep.subr.bf16.mxu0 0
        %388 = vmatpush2.bf16.msra.mxu0 0
        %389 = vmatprep.subr.bf16.mxu0 0
        %390 = vmatpush2.bf16.msra.mxu0 0
        %391 = vmatprep.subr.bf16.mxu0 0
        %392 = vmatpush2.bf16.msra.mxu0 0
        %393 = vmatprep.subr.bf16.mxu0 0
        %394 = vmatpush2.bf16.msra.mxu0 0
        %395 = vmatprep.subr.bf16.mxu0 0
        %396 = vmatpush2.bf16.msra.mxu0 0
        %397 = vmatprep.subr.bf16.mxu0 0
        %398 = vmatpush2.bf16.msra.mxu0 0
        %399 = vmatprep.subr.bf16.mxu0 0
        %400 = vmatpush2.bf16.msra.mxu0 0
        %401 = vmatprep.mubr.bf16.mxu0 0
        %402 = vmatmul.mubr.bf16.gmra.mxu0 %v311
        %v403 = vpop.f32.mrf.mxu0
        %v404 = vadd.f32 %v291, %v403
        %v405 = vpop.f32.mrf.mxu0
        %v406 = vpop.f32.mrf.mxu0
        %v407 = vadd.f32 %v291, %v406
        %v408 = vpop.f32.mrf.mxu0
        %409 = vmatprep.mubr.bf16.mxu0 0
        %410 = vmatmul.mubr.bf16.gmra.mxu0 %v312
        %v411 = vpop.f32.mrf.mxu0
        %v412 = vadd.f32 %v291, %v411
        %v413 = vpop.f32.mrf.mxu0
        %v414 = vpop.f32.mrf.mxu0
        %v415 = vadd.f32 %v291, %v414
        %v416 = vpop.f32.mrf.mxu0
        %417 = vmatprep.mubr.bf16.mxu0 0
        %418 = vmatmul.mubr.bf16.gmra.mxu0 %v313
        %v419 = vpop.f32.mrf.mxu0
        %v420 = vadd.f32 %v291, %v419
        %v421 = vpop.f32.mrf.mxu0
        %v422 = vpop.f32.mrf.mxu0
        %v423 = vadd.f32 %v291, %v422
        %v424 = vpop.f32.mrf.mxu0
        %425 = vmatprep.mubr.bf16.mxu0 0
        %426 = vmatmul.mubr.bf16.gmra.mxu0 %v314
        %v427 = vpop.f32.mrf.mxu0
        %v428 = vadd.f32 %v291, %v427
        %v429 = vpop.f32.mrf.mxu0
        %v430 = vpop.f32.mrf.mxu0
        %v431 = vadd.f32 %v291, %v430
        %v432 = vpop.f32.mrf.mxu0
        %433 = vmatprep.mubr.bf16.mxu0 0
        %434 = vmatmul.mubr.bf16.gmra.mxu0 %v315
        %v435 = vpop.f32.mrf.mxu0
        %v436 = vadd.f32 %v291, %v435
        %v437 = vpop.f32.mrf.mxu0
        %v438 = vpop.f32.mrf.mxu0
        %v439 = vpop.f32.mrf.mxu0
        %440 = vdwg.mxu0
        %v441 = vmax.f32 %v404, 0.0
        %v442 = vmax.f32 %v407, 0.0
        %v443 = vmax.f32 %v412, 0.0
        %v444 = vmax.f32 %v415, 0.0
        %v445 = vmax.f32 %v420, 0.0
        %v446 = vmax.f32 %v423, 0.0
        %v447 = vmax.f32 %v428, 0.0
        %v448 = vmax.f32 %v431, 0.0
        %v449 = vmax.f32 %v436, 0.0
        %450 = vst [vmem:[%s259] sm:$0xff] %v441
        %451 = vst [vmem:[%s259 + $0x8] sm:$0xff] %v442
        %452 = vst [vmem:[%s259 + $0x10] sm:$0xff] %v443
        %453 = vst [vmem:[%s259 + $0x18] sm:$0xff] %v444
        %454 = vst [vmem:[%s259 + $0x20] sm:$0xff] %v445
        %455 = vst [vmem:[%s259 + $0x28] sm:$0xff] %v446
        %456 = vst [vmem:[%s259 + $0x30] sm:$0xff] %v447
        %457 = vst [vmem:[%s259 + $0x38] sm:$0xff] %v448
        %458 = vst [vmem:[%s259 + $0x40] sm:$0xff] %v449
        %s459 = sand.u32 %s109, 1
        %s460 = scalar_lea.sflag [#allocation4], %s459
        %s461 = sand.u32 %s109, 1
        %s462 = smul.addr %s461, 72
        %s463 = scalar_lea.vmem [#allocation8], %s462
        // Predicated region
        $region45: #{tpu_custom_call.1} parent=31 // pred_check
          %p464 = pneg %p119
        $region46: #{tpu_custom_call.1} parent=31 // pred_check_branch
          %466 = sbr.rel (%p464) target = $region48
        $region47: #{tpu_custom_call.1} parent=31 // pred_region
          %s468 = ssub.s32 1152, 1152
          %469 = vsyncadd %s460, %s468
          %s470 = smul.addr %s23, 9
          %s471 = smul.addr %s470, 128
          %s472 = scalar_lea.hbm %s3, %s471
          %s473 = sshll.u32 %s463, 4
          %s474 = int_to_ptr.vmem [resolvable:$true] %s473
          %479 = dma.vmem_to_hbm [thread:$0]  %s474, 1152, %s472, %s460, 128, 128, 8
        $region48: #{tpu_custom_call.1} parent=31 // pred_fallthru
          _
      $region32: #{tpu_custom_call.1} parent=5 // pred_fallthru
        _
      %p480 = scmp.le.s32.totalorder 2, %s18
      // Predicated region
      $region49: #{tpu_custom_call.1} parent=5 // pred_check
        %p481 = pneg %p480
      $region50: #{tpu_custom_call.1} parent=5 // pred_check_branch
        %483 = sbr.rel (%p481) target = $region52
      $region51: #{tpu_custom_call.1} parent=5 // pred_region
        %s484 = ssub.s32 %s18, 2
        // Predicated region
        $region53: #{tpu_custom_call.1} parent=51 // pred_check
          %p485 = pneg %p125
        $region54: #{tpu_custom_call.1} parent=51 // pred_check_branch
          %487 = sbr.rel (%p485) target = $region56
        $region55: #{tpu_custom_call.1} parent=51 // pred_region
          %s488 = sand.u32 %s110, 1
          %s489 = scalar_lea.sflag [#allocation4], %s488
          %s490 = sand.u32 %s110, 1
          %s491 = smul.addr %s490, 72
          %s492 = scalar_lea.vmem [#allocation8], %s491
          %493 = dma.done %s489, 1152
        $region56: #{tpu_custom_call.1} parent=51 // pred_fallthru
          _
      $region52: #{tpu_custom_call.1} parent=5 // pred_fallthru
        _
    $region6: #{tpu_custom_call.1} parent=1 // loop_footer
      %s22 = sadd.s32 1, %s18
    $region7: #{tpu_custom_call.1} parent=1 // loop_footer_branch
      %17 = sbr.rel target = $region3
    $region8: #{tpu_custom_call.1} parent=1 // loop_exit
      _
    %494 = vsyncpa [#allocation3], 1
    %s495 = scalar_lea.sflag [#allocation3], 1
    %496 = vsyncpa %s495, 1
    %497 = vsyncpa [#allocation6], 1
    %s498 = scalar_lea.sflag [#allocation6], 1
    %499 = vsyncpa %s498, 1
    %500 = vsyncpa [#allocation4], 1
    %s501 = scalar_lea.sflag [#allocation4], 1
    %502 = vsyncpa %s501, 1

</llo_original>
